<compile_context>
chip_gen: v5e
topology: v5e:2x2
jax: 0.10.0
libtpu: 0.0.40
codegen_flags: <defaults>
</compile_context>

<pallas_src>
import functools

import jax
import jax.numpy as jnp
from jax.experimental import pallas as pl
from jax.experimental.pallas import tpu as pltpu


def _lrelu(x):
    # torch.nn.LeakyReLU(negative_slope=0.2)
    return jnp.where(x >= 0, x, 0.2 * x)


def render_mlp_kernel(x_ref, m_ref, wmod_ref, beta_ref,
                      w1_ref, wm_ref, b1_ref,
                      ws_ref, bs_ref, wc_ref, bc_ref,
                      out_ref, *, one_hot_m, out_sigma_dim):
    # Channels-first tiles: points live on the 128-lane axis.
    x = x_ref[0].astype(jnp.bfloat16)                         # (IN, TP)

    if one_hot_m:
        lab = m_ref[0]                                        # (1, TP) int32 labels
        n_mask, tp = wm_ref.shape[1], lab.shape[-1]
        mb = (jax.lax.broadcasted_iota(jnp.int32, (n_mask, tp), 0) == lab
              ).astype(jnp.bfloat16)                          # (MASK, TP) one-hot
    else:
        mb = m_ref[0].astype(jnp.bfloat16)                    # (MASK, TP) soft mask

    # fc_1 + fc_m_a: bf16 operands, f32 accumulation, f32 bias/activation.
    f = (jnp.dot(w1_ref[...], x, preferred_element_type=jnp.float32)
         + jnp.dot(wm_ref[...], mb, preferred_element_type=jnp.float32)
         + b1_ref[...])
    fb = _lrelu(f).astype(jnp.bfloat16)

    def mod_layer(fin_b16, k):
        # ModLinear(bias=False, mod_bias=True, output_mode=True):
        # alpha is pre-folded into the weight; beta is the per-out-feature additive mod.
        out = (jnp.dot(wmod_ref[0, k], fin_b16, preferred_element_type=jnp.float32)
               + beta_ref[0, k])
        return _lrelu(out)                                    # elementwise kept in f32

    fb = mod_layer(fb, 0).astype(jnp.bfloat16)                # fc_2
    fb = mod_layer(fb, 1).astype(jnp.bfloat16)                # fc_3
    f4b = mod_layer(fb, 2).astype(jnp.bfloat16)               # fc_4
    sigma = (jnp.dot(ws_ref[...], f4b, preferred_element_type=jnp.float32)
             + bs_ref[...])
    fb = mod_layer(f4b, 3).astype(jnp.bfloat16)               # fc_5
    f6b = mod_layer(fb, 4).astype(jnp.bfloat16)               # fc_6
    color = (jnp.dot(wc_ref[...], f6b, preferred_element_type=jnp.float32)
             + bc_ref[...])

    # Single merged, lane-dense output block: sigma rows then color rows.
    out_ref[0, :out_sigma_dim, :] = sigma.astype(out_ref.dtype)
    out_ref[0, out_sigma_dim:, :] = color.astype(out_ref.dtype)


def render_mlp_forward(x, z, m, p, *, tp=8192, m_labels=None, m_is_one_hot=True):
    """x: (N,H,W,M,IN) f32, z: (N,STYLE) f32, m: (N,H,W,M,MASK) one-hot f32.

    If m is a true one-hot segmentation map (the module's documented contract),
    integer labels are shipped to the kernel and the one-hot is rebuilt in-kernel.
    Set m_is_one_hot=False (or don't pass m_labels) for soft masks.
    """
    N, H, W, M, IN = x.shape
    P = H * W * M
    MASK = m.shape[-1]
    HID = p['w1'].shape[0]
    OS = p['ws'].shape[0]
    OC = p['wc'].shape[0]
    hp = jax.lax.Precision.HIGHEST
    LANE = 128

    # ---- point tiling: lane-aligned even for small / odd P ----
    if P <= tp:
        TP = max(LANE, -(-P // LANE) * LANE)
    else:
        TP = max(LANE, (tp // LANE) * LANE)
    num_tiles = pl.cdiv(P, TP)
    P_pad = num_tiles * TP

    # ---- channels-first inputs, points on lanes ----
    # TODO(synk): if the upstream producer can emit x channels-first (N, IN, P),
    # drop this transpose — it is the only remaining HBM round-trip in the wrapper.
    x2 = jnp.transpose(x.reshape(N, P, IN), (0, 2, 1))         # (N, IN, P)
    if P_pad != P:
        x2 = jnp.pad(x2, ((0, 0), (0, 0), (0, P_pad - P)))

    use_labels = m_is_one_hot or (m_labels is not None)
    if use_labels:
        if m_labels is None:
            m_labels = jnp.argmax(m, axis=-1)                  # exact for one-hot m
        m_in = m_labels.reshape(N, 1, P).astype(jnp.int32)
        m_block = (1, 1, TP)
    else:
        # TODO(synk): soft (non-one-hot) masks keep the full matmul path.
        m_in = jnp.transpose(m.reshape(N, P, MASK), (0, 2, 1))  # (N, MASK, P)
        m_block = (1, MASK, TP)
    if P_pad != P:
        m_in = jnp.pad(m_in, ((0, 0), (0, 0), (0, P_pad - P)))

    # ---- per-batch style modulation folded into the weights (tiny, f32) ----
    w_stack = jnp.stack([p['w2'], p['w3'], p['w4'], p['w5'], p['w6']], axis=0)
    alphas = jnp.stack(
        [jnp.matmul(z, p[f'wa{i}'].T, precision=hp) + 1.0 for i in (2, 3, 4, 5, 6)],
        axis=1)                                                # (N,5,HID)
    betas = jnp.stack(
        [jnp.matmul(z, p[f'wb{i}'].T, precision=hp) for i in (2, 3, 4, 5, 6)],
        axis=1)[..., None]                                     # (N,5,HID,1) f32
    wmod = (w_stack[None] * alphas[:, :, None, :]).astype(jnp.bfloat16)

    # bf16 matmul operands (accumulation stays f32 in the kernel)
    w1_b = p['w1'].astype(jnp.bfloat16)
    wm_b = p['wm'].astype(jnp.bfloat16)
    ws_b = p['ws'].astype(jnp.bfloat16)
    wc_b = p['wc'].astype(jnp.bfloat16)

    def full(shape):
        nd = len(shape)
        return pl.BlockSpec(shape, lambda n, t, _nd=nd: (0,) * _nd)

    def per_batch(shape):
        nd = len(shape)
        return pl.BlockSpec(shape, lambda n, t, _nd=nd: (n,) + (0,) * (_nd - 1))

    kernel = functools.partial(render_mlp_kernel,
                               one_hot_m=use_labels, out_sigma_dim=OS)

    out = pl.pallas_call(
        kernel,
        out_shape=jax.ShapeDtypeStruct((N, OS + OC, P_pad), x.dtype),
        grid=(N, num_tiles),
        in_specs=[
            pl.BlockSpec((1, IN, TP), lambda n, t: (n, 0, t)),   # x tile
            pl.BlockSpec(m_block, lambda n, t: (n, 0, t)),       # labels / soft mask tile
            per_batch((1, 5, HID, HID)),                         # alpha-folded fc_2..fc_6
            per_batch((1, 5, HID, 1)),                           # beta (output-mode bias)
            full((HID, IN)),                                     # w1
            full((HID, MASK)),                                   # wm
            full((HID, 1)),                                      # b1
            full((OS, HID)),                                     # ws
            full((OS, 1)),                                       # bs
            full((OC, HID)),                                     # wc
            full((OC, 1)),                                       # bc
        ],
        out_specs=pl.BlockSpec((1, OS + OC, TP), lambda n, t: (n, 0, t)),
        compiler_params=pltpu.CompilerParams(
            dimension_semantics=("parallel", "parallel"),
            vmem_limit_bytes=48 * 1024 * 1024),   # fits v7x's 64 MiB; ample on v5e/v6e
    )(x2, m_in, wmod, betas,
      w1_b, wm_b, p['b1'].reshape(HID, 1),
      ws_b, p['bs'].reshape(OS, 1),
      wc_b, p['bc'].reshape(OC, 1))

    out = jnp.transpose(out[:, :, :P], (0, 2, 1)).reshape(N, H, W, M, OS + OC)
    return out[..., :OS], out[..., OS:]


def render_mlp_reference(x, z, m, p):
    """Pure-JAX f32 reference matching the PyTorch forward."""
    hp = jax.lax.Precision.HIGHEST

    def lin(a, w, b=None):
        out = jnp.matmul(a, w.T, precision=hp)
        return out if b is None else out + b

    zz = z[:, None, None, None, :]

    def modlinear(f, w, wa, wb):
        alpha = jnp.matmul(zz, wa.T, precision=hp) + 1.0   # bias_alpha = 1
        beta = jnp.matmul(zz, wb.T, precision=hp)          # bias_beta = 0
        return jnp.matmul(f * alpha, w.T, precision=hp) + beta

    f = lin(x, p['w1'], p['b1']) + lin(m, p['wm'])
    f = _lrelu(f)
    f = _lrelu(modlinear(f, p['w2'], p['wa2'], p['wb2']))
    f = _lrelu(modlinear(f, p['w3'], p['wa3'], p['wb3']))
    f = _lrelu(modlinear(f, p['w4'], p['wa4'], p['wb4']))
    sigma = lin(f, p['ws'], p['bs'])
    f = _lrelu(modlinear(f, p['w5'], p['wa5'], p['wb5']))
    f = _lrelu(modlinear(f, p['w6'], p['wa6'], p['wb6']))
    c = lin(f, p['wc'], p['bc'])
    return sigma, c


def init_params(key, in_dim, hid, style, mask, out_sigma, out_color):
    ks = jax.random.split(key, 32)
    ki = iter(range(32))
    nrm = lambda shape: jax.random.normal(ks[next(ki)], shape, jnp.float32)
    p = {}
    # fc_1 (Linear with bias), fc_m_a (Linear, bias=False)
    p['w1'] = nrm((hid, in_dim)) / jnp.sqrt(float(in_dim))
    p['b1'] = nrm((hid,)) * 0.1
    p['wm'] = nrm((hid, mask)) / jnp.sqrt(float(mask))
    # fc_2..fc_6: ModLinear(hid, hid, style, bias=False, mod_bias=True, output_mode=True)
    for i in (2, 3, 4, 5, 6):
        p[f'w{i}'] = nrm((hid, hid)) / jnp.sqrt(float(hid))       # weight
        p[f'wa{i}'] = nrm((hid, style)) / jnp.sqrt(float(style))  # weight_alpha
        p[f'wb{i}'] = nrm((hid, style)) / jnp.sqrt(float(style))  # weight_beta
    # fc_sigma / fc_out_c (Linear with bias)
    p['ws'] = nrm((out_sigma, hid)) / jnp.sqrt(float(hid))
    p['bs'] = nrm((out_sigma,)) * 0.1
    p['wc'] = nrm((out_color, hid)) / jnp.sqrt(float(hid))
    p['bc'] = nrm((out_color,)) * 0.1
    return p


def _check(name, got, ref, tol=2.5e-2):
    # bf16 matmul-operand kernel vs f32 reference: scale-normalized max error.
    scale = max(float(jnp.max(jnp.abs(ref))), 1.0)
    err = float(jnp.max(jnp.abs(got - ref)))
    assert err <= tol * scale, f"{name} mismatch: max_err={err:.4g} scale={scale:.4g}"


if __name__ == "__main__":
    # Small config: in_dim=24 (HASH_GRID 8 levels x 3 dims), hidden=32,
    # style=16, mask = N_CLASSES+1 = 12 (BUILDING_MODE), sigma=1, color=3.
    N, H, W, M = 2, 4, 4, 4
    IN, HID, STYLE, MASK, OS, OC = 24, 32, 16, 12, 1, 3

    key = jax.random.PRNGKey(0)
    kx, kz, km, kp = jax.random.split(key, 4)
    x = jax.random.normal(kx, (N, H, W, M, IN), jnp.float32)
    z = jax.random.normal(kz, (N, STYLE), jnp.float32)
    labels = jax.random.randint(km, (N, H, W, M), 0, MASK)
    m = jax.nn.one_hot(labels, MASK, dtype=jnp.float32)

    params = init_params(kp, IN, HID, STYLE, MASK, OS, OC)

    # Primary path: one-hot segmentation maps shipped as int labels.
    fwd_labels = jax.jit(
        lambda x_, z_, m_, lab_: render_mlp_forward(x_, z_, m_, params, m_labels=lab_))
    sigma, c = fwd_labels(x, z, m, labels)
    jax.block_until_ready((sigma, c))

    # Fallback path: soft-mask matmul (same kernel structure, one_hot_m=False).
    fwd_soft = jax.jit(
        lambda x_, z_, m_: render_mlp_forward(x_, z_, m_, params, m_is_one_hot=False))
    sigma_s, c_s = fwd_soft(x, z, m)
    jax.block_until_ready((sigma_s, c_s))

    sigma_ref, c_ref = render_mlp_reference(x, z, m, params)
    assert sigma.shape == (N, H, W, M, OS) and c.shape == (N, H, W, M, OC)
    _check("sigma(labels)", sigma, sigma_ref)
    _check("color(labels)", c, c_ref)
    _check("sigma(soft)", sigma_s, sigma_ref)
    _check("color(soft)", c_s, c_ref)

    print("KERNEL_OK")
</pallas_src>

<mosaic_0001>
module attributes {stable_mosaic.version = 11 : i64} {
  func.func @render_mlp_kernel(%arg0: i32, %arg1: i32, %arg2: memref<1x24x128xf32, #tpu.memory_space<vmem>>, %arg3: memref<1x1x128xi32, #tpu.memory_space<vmem>>, %arg4: memref<1x5x32x32xbf16, #tpu.memory_space<vmem>>, %arg5: memref<1x5x32x1xf32, #tpu.memory_space<vmem>>, %arg6: memref<32x24xbf16, #tpu.memory_space<vmem>>, %arg7: memref<32x12xbf16, #tpu.memory_space<vmem>>, %arg8: memref<32x1xf32, #tpu.memory_space<vmem>>, %arg9: memref<1x32xbf16, #tpu.memory_space<vmem>>, %arg10: memref<1x1xf32, #tpu.memory_space<vmem>>, %arg11: memref<3x32xbf16, #tpu.memory_space<vmem>>, %arg12: memref<3x1xf32, #tpu.memory_space<vmem>>, %arg13: memref<1x4x128xf32, #tpu.memory_space<vmem>>) attributes {dimension_semantics = [#tpu.dimension_semantics<parallel>, #tpu.dimension_semantics<parallel>], iteration_bounds = array<i64: 2, 1>, scalar_prefetch = 0 : i64, scratch_operands = 0 : i64, tpu.core_type = #tpu.core_type<tc>, window_params = [{transform_indices = @transform_0, window_bounds = array<i64: 1, 24, 128>}, {transform_indices = @transform_1, window_bounds = array<i64: 1, 1, 128>}, {transform_indices = @transform_2, window_bounds = array<i64: 1, 5, 32, 32>}, {transform_indices = @transform_3, window_bounds = array<i64: 1, 5, 32, 1>}, {pipeline_mode = #tpu.pipeline_mode<synchronous>, transform_indices = @transform_4, window_bounds = array<i64: 32, 24>}, {pipeline_mode = #tpu.pipeline_mode<synchronous>, transform_indices = @transform_5, window_bounds = array<i64: 32, 12>}, {pipeline_mode = #tpu.pipeline_mode<synchronous>, transform_indices = @transform_6, window_bounds = array<i64: 32, 1>}, {pipeline_mode = #tpu.pipeline_mode<synchronous>, transform_indices = @transform_7, window_bounds = array<i64: 1, 32>}, {pipeline_mode = #tpu.pipeline_mode<synchronous>, transform_indices = @transform_8, window_bounds = array<i64: 1, 1>}, {pipeline_mode = #tpu.pipeline_mode<synchronous>, transform_indices = @transform_9, window_bounds = array<i64: 3, 32>}, {pipeline_mode = #tpu.pipeline_mode<synchronous>, transform_indices = @transform_10, window_bounds = array<i64: 3, 1>}, {transform_indices = @transform_11, window_bounds = array<i64: 1, 4, 128>}]} {
    %c0 = arith.constant 0 : index
    %c0_0 = arith.constant 0 : index
    %c0_1 = arith.constant 0 : index
    %0 = vector.load %arg2[%c0, %c0_0, %c0_1] : memref<1x24x128xf32, #tpu.memory_space<vmem>>, vector<1x24x128xf32>
    %1 = vector.shape_cast %0 : vector<1x24x128xf32> to vector<24x128xf32>
    %2 = arith.truncf %1 : vector<24x128xf32> to vector<24x128xbf16>
    %c0_2 = arith.constant 0 : index
    %c0_3 = arith.constant 0 : index
    %c0_4 = arith.constant 0 : index
    %3 = vector.load %arg3[%c0_2, %c0_3, %c0_4] : memref<1x1x128xi32, #tpu.memory_space<vmem>>, vector<1x1x128xi32>
    %4 = vector.shape_cast %3 : vector<1x1x128xi32> to vector<1x128xi32>
    %5 = tpu.iota {dimensions = array<i32: 0>} : vector<12x128xi32>
    %6 = vector.broadcast %4 : vector<1x128xi32> to vector<12x128xi32>
    %7 = arith.cmpi eq, %5, %6 : vector<12x128xi32>
    %8 = arith.extui %7 : vector<12x128xi1> to vector<12x128xi32>
    %9 = arith.sitofp %8 : vector<12x128xi32> to vector<12x128xf32>
    %10 = arith.truncf %9 : vector<12x128xf32> to vector<12x128xbf16>
    %c0_5 = arith.constant 0 : index
    %c0_6 = arith.constant 0 : index
    %11 = vector.load %arg6[%c0_5, %c0_6] : memref<32x24xbf16, #tpu.memory_space<vmem>>, vector<32x24xbf16>
    %cst = arith.constant dense<0.000000e+00> : vector<32x128xf32>
    %12 = tpu.matmul %11, %2, %cst {dimension_numbers = #tpu.dot_dimension_numbers<[1], [0], [0], [1], [0, 0, 1, 1], [], []>} : vector<32x24xbf16>, vector<24x128xbf16>, vector<32x128xf32> -> vector<32x128xf32>
    %c0_7 = arith.constant 0 : index
    %c0_8 = arith.constant 0 : index
    %13 = vector.load %arg7[%c0_7, %c0_8] : memref<32x12xbf16, #tpu.memory_space<vmem>>, vector<32x12xbf16>
    %cst_9 = arith.constant dense<0.000000e+00> : vector<32x128xf32>
    %14 = tpu.matmul %13, %10, %cst_9 {dimension_numbers = #tpu.dot_dimension_numbers<[1], [0], [0], [1], [0, 0, 1, 1], [], []>} : vector<32x12xbf16>, vector<12x128xbf16>, vector<32x128xf32> -> vector<32x128xf32>
    %15 = arith.addf %12, %14 : vector<32x128xf32>
    %c0_10 = arith.constant 0 : index
    %c0_11 = arith.constant 0 : index
    %16 = vector.load %arg8[%c0_10, %c0_11] : memref<32x1xf32, #tpu.memory_space<vmem>>, vector<32x1xf32>
    %17 = vector.broadcast %16 : vector<32x1xf32> to vector<32x128xf32>
    %18 = arith.addf %15, %17 : vector<32x128xf32>
    %cst_12 = arith.constant 0.000000e+00 : f32
    %19 = vector.broadcast %cst_12 : f32 to vector<32x128xf32>
    %20 = arith.cmpf oge, %18, %19 : vector<32x128xf32>
    %cst_13 = arith.constant 2.000000e-01 : f32
    %21 = vector.broadcast %cst_13 : f32 to vector<32x128xf32>
    %22 = arith.mulf %21, %18 : vector<32x128xf32>
    %23 = arith.select %20, %18, %22 : vector<32x128xi1>, vector<32x128xf32>
    %24 = arith.truncf %23 : vector<32x128xf32> to vector<32x128xbf16>
    %c0_14 = arith.constant 0 : index
    %c0_15 = arith.constant 0 : index
    %c0_16 = arith.constant 0 : index
    %c0_17 = arith.constant 0 : index
    %25 = vector.load %arg4[%c0_14, %c0_15, %c0_16, %c0_17] : memref<1x5x32x32xbf16, #tpu.memory_space<vmem>>, vector<1x1x32x32xbf16>
    %26 = vector.shape_cast %25 : vector<1x1x32x32xbf16> to vector<32x32xbf16>
    %cst_18 = arith.constant dense<0.000000e+00> : vector<32x128xf32>
    %27 = tpu.matmul %26, %24, %cst_18 {dimension_numbers = #tpu.dot_dimension_numbers<[1], [0], [0], [1], [0, 0, 1, 1], [], []>} : vector<32x32xbf16>, vector<32x128xbf16>, vector<32x128xf32> -> vector<32x128xf32>
    %c0_19 = arith.constant 0 : index
    %c0_20 = arith.constant 0 : index
    %c0_21 = arith.constant 0 : index
    %c0_22 = arith.constant 0 : index
    %28 = vector.load %arg5[%c0_19, %c0_20, %c0_21, %c0_22] : memref<1x5x32x1xf32, #tpu.memory_space<vmem>>, vector<1x1x32x1xf32>
    %29 = vector.shape_cast %28 : vector<1x1x32x1xf32> to vector<32x1xf32>
    %30 = vector.broadcast %29 : vector<32x1xf32> to vector<32x128xf32>
    %31 = arith.addf %27, %30 : vector<32x128xf32>
    %cst_23 = arith.constant 0.000000e+00 : f32
    %32 = vector.broadcast %cst_23 : f32 to vector<32x128xf32>
    %33 = arith.cmpf oge, %31, %32 : vector<32x128xf32>
    %cst_24 = arith.constant 2.000000e-01 : f32
    %34 = vector.broadcast %cst_24 : f32 to vector<32x128xf32>
    %35 = arith.mulf %34, %31 : vector<32x128xf32>
    %36 = arith.select %33, %31, %35 : vector<32x128xi1>, vector<32x128xf32>
    %37 = arith.truncf %36 : vector<32x128xf32> to vector<32x128xbf16>
    %c0_25 = arith.constant 0 : index
    %c1 = arith.constant 1 : index
    %c0_26 = arith.constant 0 : index
    %c0_27 = arith.constant 0 : index
    %38 = vector.load %arg4[%c0_25, %c1, %c0_26, %c0_27] : memref<1x5x32x32xbf16, #tpu.memory_space<vmem>>, vector<1x1x32x32xbf16>
    %39 = vector.shape_cast %38 : vector<1x1x32x32xbf16> to vector<32x32xbf16>
    %cst_28 = arith.constant dense<0.000000e+00> : vector<32x128xf32>
    %40 = tpu.matmul %39, %37, %cst_28 {dimension_numbers = #tpu.dot_dimension_numbers<[1], [0], [0], [1], [0, 0, 1, 1], [], []>} : vector<32x32xbf16>, vector<32x128xbf16>, vector<32x128xf32> -> vector<32x128xf32>
    %c0_29 = arith.constant 0 : index
    %c1_30 = arith.constant 1 : index
    %c0_31 = arith.constant 0 : index
    %c0_32 = arith.constant 0 : index
    %41 = vector.load %arg5[%c0_29, %c1_30, %c0_31, %c0_32] : memref<1x5x32x1xf32, #tpu.memory_space<vmem>>, vector<1x1x32x1xf32>
    %42 = vector.shape_cast %41 : vector<1x1x32x1xf32> to vector<32x1xf32>
    %43 = vector.broadcast %42 : vector<32x1xf32> to vector<32x128xf32>
    %44 = arith.addf %40, %43 : vector<32x128xf32>
    %cst_33 = arith.constant 0.000000e+00 : f32
    %45 = vector.broadcast %cst_33 : f32 to vector<32x128xf32>
    %46 = arith.cmpf oge, %44, %45 : vector<32x128xf32>
    %cst_34 = arith.constant 2.000000e-01 : f32
    %47 = vector.broadcast %cst_34 : f32 to vector<32x128xf32>
    %48 = arith.mulf %47, %44 : vector<32x128xf32>
    %49 = arith.select %46, %44, %48 : vector<32x128xi1>, vector<32x128xf32>
    %50 = arith.truncf %49 : vector<32x128xf32> to vector<32x128xbf16>
    %c0_35 = arith.constant 0 : index
    %c2 = arith.constant 2 : index
    %c0_36 = arith.constant 0 : index
    %c0_37 = arith.constant 0 : index
    %51 = vector.load %arg4[%c0_35, %c2, %c0_36, %c0_37] : memref<1x5x32x32xbf16, #tpu.memory_space<vmem>>, vector<1x1x32x32xbf16>
    %52 = vector.shape_cast %51 : vector<1x1x32x32xbf16> to vector<32x32xbf16>
    %cst_38 = arith.constant dense<0.000000e+00> : vector<32x128xf32>
    %53 = tpu.matmul %52, %50, %cst_38 {dimension_numbers = #tpu.dot_dimension_numbers<[1], [0], [0], [1], [0, 0, 1, 1], [], []>} : vector<32x32xbf16>, vector<32x128xbf16>, vector<32x128xf32> -> vector<32x128xf32>
    %c0_39 = arith.constant 0 : index
    %c2_40 = arith.constant 2 : index
    %c0_41 = arith.constant 0 : index
    %c0_42 = arith.constant 0 : index
    %54 = vector.load %arg5[%c0_39, %c2_40, %c0_41, %c0_42] : memref<1x5x32x1xf32, #tpu.memory_space<vmem>>, vector<1x1x32x1xf32>
    %55 = vector.shape_cast %54 : vector<1x1x32x1xf32> to vector<32x1xf32>
    %56 = vector.broadcast %55 : vector<32x1xf32> to vector<32x128xf32>
    %57 = arith.addf %53, %56 : vector<32x128xf32>
    %cst_43 = arith.constant 0.000000e+00 : f32
    %58 = vector.broadcast %cst_43 : f32 to vector<32x128xf32>
    %59 = arith.cmpf oge, %57, %58 : vector<32x128xf32>
    %cst_44 = arith.constant 2.000000e-01 : f32
    %60 = vector.broadcast %cst_44 : f32 to vector<32x128xf32>
    %61 = arith.mulf %60, %57 : vector<32x128xf32>
    %62 = arith.select %59, %57, %61 : vector<32x128xi1>, vector<32x128xf32>
    %63 = arith.truncf %62 : vector<32x128xf32> to vector<32x128xbf16>
    %c0_45 = arith.constant 0 : index
    %c0_46 = arith.constant 0 : index
    %64 = vector.load %arg9[%c0_45, %c0_46] : memref<1x32xbf16, #tpu.memory_space<vmem>>, vector<1x32xbf16>
    %cst_47 = arith.constant dense<0.000000e+00> : vector<1x128xf32>
    %65 = tpu.matmul %64, %63, %cst_47 {dimension_numbers = #tpu.dot_dimension_numbers<[1], [0], [0], [1], [0, 0, 1, 1], [], []>} : vector<1x32xbf16>, vector<32x128xbf16>, vector<1x128xf32> -> vector<1x128xf32>
    %c0_48 = arith.constant 0 : index
    %c0_49 = arith.constant 0 : index
    %66 = vector.load %arg10[%c0_48, %c0_49] : memref<1x1xf32, #tpu.memory_space<vmem>>, vector<1x1xf32>
    %67 = vector.broadcast %66 : vector<1x1xf32> to vector<1x128xf32>
    %68 = arith.addf %65, %67 : vector<1x128xf32>
    %c0_50 = arith.constant 0 : index
    %c3 = arith.constant 3 : index
    %c0_51 = arith.constant 0 : index
    %c0_52 = arith.constant 0 : index
    %69 = vector.load %arg4[%c0_50, %c3, %c0_51, %c0_52] : memref<1x5x32x32xbf16, #tpu.memory_space<vmem>>, vector<1x1x32x32xbf16>
    %70 = vector.shape_cast %69 : vector<1x1x32x32xbf16> to vector<32x32xbf16>
    %cst_53 = arith.constant dense<0.000000e+00> : vector<32x128xf32>
    %71 = tpu.matmul %70, %63, %cst_53 {dimension_numbers = #tpu.dot_dimension_numbers<[1], [0], [0], [1], [0, 0, 1, 1], [], []>} : vector<32x32xbf16>, vector<32x128xbf16>, vector<32x128xf32> -> vector<32x128xf32>
    %c0_54 = arith.constant 0 : index
    %c3_55 = arith.constant 3 : index
    %c0_56 = arith.constant 0 : index
    %c0_57 = arith.constant 0 : index
    %72 = vector.load %arg5[%c0_54, %c3_55, %c0_56, %c0_57] : memref<1x5x32x1xf32, #tpu.memory_space<vmem>>, vector<1x1x32x1xf32>
    %73 = vector.shape_cast %72 : vector<1x1x32x1xf32> to vector<32x1xf32>
    %74 = vector.broadcast %73 : vector<32x1xf32> to vector<32x128xf32>
    %75 = arith.addf %71, %74 : vector<32x128xf32>
    %cst_58 = arith.constant 0.000000e+00 : f32
    %76 = vector.broadcast %cst_58 : f32 to vector<32x128xf32>
    %77 = arith.cmpf oge, %75, %76 : vector<32x128xf32>
    %cst_59 = arith.constant 2.000000e-01 : f32
    %78 = vector.broadcast %cst_59 : f32 to vector<32x128xf32>
    %79 = arith.mulf %78, %75 : vector<32x128xf32>
    %80 = arith.select %77, %75, %79 : vector<32x128xi1>, vector<32x128xf32>
    %81 = arith.truncf %80 : vector<32x128xf32> to vector<32x128xbf16>
    %c0_60 = arith.constant 0 : index
    %c4 = arith.constant 4 : index
    %c0_61 = arith.constant 0 : index
    %c0_62 = arith.constant 0 : index
    %82 = vector.load %arg4[%c0_60, %c4, %c0_61, %c0_62] : memref<1x5x32x32xbf16, #tpu.memory_space<vmem>>, vector<1x1x32x32xbf16>
    %83 = vector.shape_cast %82 : vector<1x1x32x32xbf16> to vector<32x32xbf16>
    %cst_63 = arith.constant dense<0.000000e+00> : vector<32x128xf32>
    %84 = tpu.matmul %83, %81, %cst_63 {dimension_numbers = #tpu.dot_dimension_numbers<[1], [0], [0], [1], [0, 0, 1, 1], [], []>} : vector<32x32xbf16>, vector<32x128xbf16>, vector<32x128xf32> -> vector<32x128xf32>
    %c0_64 = arith.constant 0 : index
    %c4_65 = arith.constant 4 : index
    %c0_66 = arith.constant 0 : index
    %c0_67 = arith.constant 0 : index
    %85 = vector.load %arg5[%c0_64, %c4_65, %c0_66, %c0_67] : memref<1x5x32x1xf32, #tpu.memory_space<vmem>>, vector<1x1x32x1xf32>
    %86 = vector.shape_cast %85 : vector<1x1x32x1xf32> to vector<32x1xf32>
    %87 = vector.broadcast %86 : vector<32x1xf32> to vector<32x128xf32>
    %88 = arith.addf %84, %87 : vector<32x128xf32>
    %cst_68 = arith.constant 0.000000e+00 : f32
    %89 = vector.broadcast %cst_68 : f32 to vector<32x128xf32>
    %90 = arith.cmpf oge, %88, %89 : vector<32x128xf32>
    %cst_69 = arith.constant 2.000000e-01 : f32
    %91 = vector.broadcast %cst_69 : f32 to vector<32x128xf32>
    %92 = arith.mulf %91, %88 : vector<32x128xf32>
    %93 = arith.select %90, %88, %92 : vector<32x128xi1>, vector<32x128xf32>
    %94 = arith.truncf %93 : vector<32x128xf32> to vector<32x128xbf16>
    %c0_70 = arith.constant 0 : index
    %c0_71 = arith.constant 0 : index
    %95 = vector.load %arg11[%c0_70, %c0_71] : memref<3x32xbf16, #tpu.memory_space<vmem>>, vector<3x32xbf16>
    %cst_72 = arith.constant dense<0.000000e+00> : vector<3x128xf32>
    %96 = tpu.matmul %95, %94, %cst_72 {dimension_numbers = #tpu.dot_dimension_numbers<[1], [0], [0], [1], [0, 0, 1, 1], [], []>} : vector<3x32xbf16>, vector<32x128xbf16>, vector<3x128xf32> -> vector<3x128xf32>
    %c0_73 = arith.constant 0 : index
    %c0_74 = arith.constant 0 : index
    %97 = vector.load %arg12[%c0_73, %c0_74] : memref<3x1xf32, #tpu.memory_space<vmem>>, vector<3x1xf32>
    %98 = vector.broadcast %97 : vector<3x1xf32> to vector<3x128xf32>
    %99 = arith.addf %96, %98 : vector<3x128xf32>
    %c0_75 = arith.constant 0 : index
    %c0_76 = arith.constant 0 : index
    %c0_77 = arith.constant 0 : index
    %100 = vector.load %arg13[%c0_75, %c0_76, %c0_77] : memref<1x4x128xf32, #tpu.memory_space<vmem>>, vector<1x1x128xf32>
    %101 = vector.shape_cast %100 : vector<1x1x128xf32> to vector<1x128xf32>
    %102 = vector.shape_cast %68 : vector<1x128xf32> to vector<1x1x128xf32>
    tpu.vector_store %arg13[%c0_75, %c0_76, %c0_77], %102 {strides = array<i32>} : memref<1x4x128xf32, #tpu.memory_space<vmem>>, vector<1x1x128xf32>,
    %c0_78 = arith.constant 0 : index
    %c1_79 = arith.constant 1 : index
    %c0_80 = arith.constant 0 : index
    %103 = vector.load %arg13[%c0_78, %c1_79, %c0_80] : memref<1x4x128xf32, #tpu.memory_space<vmem>>, vector<1x3x128xf32>
    %104 = vector.shape_cast %103 : vector<1x3x128xf32> to vector<3x128xf32>
    %105 = vector.shape_cast %99 : vector<3x128xf32> to vector<1x3x128xf32>
    tpu.vector_store %arg13[%c0_78, %c1_79, %c0_80], %105 {strides = array<i32>} : memref<1x4x128xf32, #tpu.memory_space<vmem>>, vector<1x3x128xf32>,
    return
  }
  func.func @transform_0(%arg0: i32, %arg1: i32) -> (i32, i32, i32) {
    %c0_i32 = arith.constant 0 : i32
    %c0_i32_0 = arith.constant 0 : i32
    return %arg0, %c0_i32, %arg1 : i32, i32, i32
  }
  func.func @transform_1(%arg0: i32, %arg1: i32) -> (i32, i32, i32) {
    %c0_i32 = arith.constant 0 : i32
    %c0_i32_0 = arith.constant 0 : i32
    return %arg0, %c0_i32, %arg1 : i32, i32, i32
  }
  func.func @transform_2(%arg0: i32, %arg1: i32) -> (i32, i32, i32, i32) {
    %c0_i32 = arith.constant 0 : i32
    %c0_i32_0 = arith.constant 0 : i32
    %c0_i32_1 = arith.constant 0 : i32
    %c0_i32_2 = arith.constant 0 : i32
    return %arg0, %c0_i32, %c0_i32_0, %c0_i32_1 : i32, i32, i32, i32
  }
  func.func @transform_3(%arg0: i32, %arg1: i32) -> (i32, i32, i32, i32) {
    %c0_i32 = arith.constant 0 : i32
    %c0_i32_0 = arith.constant 0 : i32
    %c0_i32_1 = arith.constant 0 : i32
    %c0_i32_2 = arith.constant 0 : i32
    return %arg0, %c0_i32, %c0_i32_0, %c0_i32_1 : i32, i32, i32, i32
  }
  func.func @transform_4(%arg0: i32, %arg1: i32) -> (i32, i32) {
    %c0_i32 = arith.constant 0 : i32
    %c0_i32_0 = arith.constant 0 : i32
    %c0_i32_1 = arith.constant 0 : i32
    return %c0_i32, %c0_i32_0 : i32, i32
  }
  func.func @transform_5(%arg0: i32, %arg1: i32) -> (i32, i32) {
    %c0_i32 = arith.constant 0 : i32
    %c0_i32_0 = arith.constant 0 : i32
    %c0_i32_1 = arith.constant 0 : i32
    return %c0_i32, %c0_i32_0 : i32, i32
  }
  func.func @transform_6(%arg0: i32, %arg1: i32) -> (i32, i32) {
    %c0_i32 = arith.constant 0 : i32
    %c0_i32_0 = arith.constant 0 : i32
    %c0_i32_1 = arith.constant 0 : i32
    return %c0_i32, %c0_i32_0 : i32, i32
  }
  func.func @transform_7(%arg0: i32, %arg1: i32) -> (i32, i32) {
    %c0_i32 = arith.constant 0 : i32
    %c0_i32_0 = arith.constant 0 : i32
    %c0_i32_1 = arith.constant 0 : i32
    return %c0_i32, %c0_i32_0 : i32, i32
  }
  func.func @transform_8(%arg0: i32, %arg1: i32) -> (i32, i32) {
    %c0_i32 = arith.constant 0 : i32
    %c0_i32_0 = arith.constant 0 : i32
    %c0_i32_1 = arith.constant 0 : i32
    return %c0_i32, %c0_i32_0 : i32, i32
  }
  func.func @transform_9(%arg0: i32, %arg1: i32) -> (i32, i32) {
    %c0_i32 = arith.constant 0 : i32
    %c0_i32_0 = arith.constant 0 : i32
    %c0_i32_1 = arith.constant 0 : i32
    return %c0_i32, %c0_i32_0 : i32, i32
  }
  func.func @transform_10(%arg0: i32, %arg1: i32) -> (i32, i32) {
    %c0_i32 = arith.constant 0 : i32
    %c0_i32_0 = arith.constant 0 : i32
    %c0_i32_1 = arith.constant 0 : i32
    return %c0_i32, %c0_i32_0 : i32, i32
  }
  func.func @transform_11(%arg0: i32, %arg1: i32) -> (i32, i32, i32) {
    %c0_i32 = arith.constant 0 : i32
    %c0_i32_0 = arith.constant 0 : i32
    return %arg0, %c0_i32, %arg1 : i32, i32, i32
  }
}

</mosaic_0001>

<llo_original>
// kernel: _lambda_.1
$region0: #{_lambda_.1}
  #allocation0 [shape = 'u32[]', space=smem, size = 0x4, offset = 0x4, fixed_abs, tag = 'smem constant byte address 0x4 - core index']
  #allocation1 [shape = 'u32[72,128]{1,0:T(1,128)}', space=vmem, size = 0x9000, scoped, tag = 'internal scratch']
  #allocation2 [shape = 'f32[1,1]{1,0:T(1,128)S(1)}', space=vmem, size = 0x200, scoped, tag = 'scoped memory for _lambda_.1']
  %s0 = inlined_call_operand.vmem [shape: f32[2,24,128], index: 0, kind: input, shape index: {}]
  %s1 = inlined_call_operand.vmem [shape: s32[2,1,128], index: 1, kind: input, shape index: {}]
  %s2 = inlined_call_operand.vmem [shape: bf16[2,5,32,32], index: 2, kind: input, shape index: {}]
  %s3 = inlined_call_operand.vmem [shape: f32[2,5,32,1], index: 3, kind: input, shape index: {}]
  %s4 = inlined_call_operand.vmem [shape: bf16[32,24], index: 4, kind: input, shape index: {}]
  %s5 = inlined_call_operand.vmem [shape: bf16[32,12], index: 5, kind: input, shape index: {}]
  %s6 = inlined_call_operand.vmem [shape: f32[32,1], index: 6, kind: input, shape index: {}]
  %s7 = inlined_call_operand.vmem [shape: bf16[1,32], index: 7, kind: input, shape index: {}]
  %s8 = inlined_call_operand.<no memory space> [shape: f32[1,1], index: 8, kind: input, shape index: {}]
  %s9 = inlined_call_operand.vmem [shape: bf16[3,32], index: 9, kind: input, shape index: {}]
  %s10 = inlined_call_operand.vmem [shape: f32[3,1], index: 10, kind: input, shape index: {}]
  %s11 = inlined_call_operand.vmem [shape: f32[2,4,128], index: 11, kind: output, shape index: {}]
  %s12 = sld [smem:[#allocation0]]
  $region77: #{_lambda_.1} parent=0
    _
  %s14 = ssub.s32 1, %s12
  %s15 = scalar_select 0, %s14, %s12
  %v16 = vstv %s8
  %17 = vst [vmem:[#allocation2] sm:$0x1] %v16
  loop: start=0, step=1, limit=4
  $region2: #{_lambda_.1} parent=0 // loop_pre_header
    _
  $region3: #{_lambda_.1} parent=0 // loop_header
    %s19 = sphi 0, %s23
    %p20 = scmp.ge.s32.totalorder %s19, 4
    %s26 = sphi 0, %s38
    %s27 = sphi 0, %s34
    %s28 = sphi 0, %s26
    %s29 = sphi 0, %s27
    %s30 = sphi 0, %s28
    %s31 = sphi 0, %s29
    %s43 = sphi 0, %s45
    %s46 = sphi 0, %s43
    %s47 = sphi 0, %s46
    %s63 = sphi 0, %s47
    %s71 = sphi 0, %s73
    %s74 = sphi 0, %s71
    %s75 = sphi 0, %s74
    %s91 = sphi 0, %s75
    %s97 = sphi 0, %s99
    %s100 = sphi 0, %s97
    %s101 = sphi 0, %s100
    %s117 = sphi 0, %s101
    %s123 = sphi 0, %s125
    %s126 = sphi 0, %s123
    %s127 = sphi 0, %s126
    %s143 = sphi 0, %s127
    %s147 = sphi 0, %s147
    %s149 = sphi 0, %s147
    %s150 = sphi 0, %s149
    %s164 = sphi 0, %s150
    %s168 = sphi 0, %s168
    %s170 = sphi 0, %s168
    %s171 = sphi 0, %s170
    %s185 = sphi 0, %s171
    %s189 = sphi 0, %s189
    %s191 = sphi 0, %s189
    %s192 = sphi 0, %s191
    %s206 = sphi 0, %s192
    %s210 = sphi 0, %s210
    %s212 = sphi 0, %s210
    %s213 = sphi 0, %s212
    %s227 = sphi 0, %s213
    %s231 = sphi 0, %s231
    %s233 = sphi 0, %s231
    %s234 = sphi 0, %s233
    %s248 = sphi 0, %s234
    %s252 = sphi 0, %s252
    %s254 = sphi 0, %s252
    %s255 = sphi 0, %s254
    %s269 = sphi 0, %s255
    %s273 = sphi 0, %s273
    %s275 = sphi 0, %s273
    %s276 = sphi 0, %s275
    %s290 = sphi 0, %s276
    %s298 = sphi 0, %s300
    %s301 = sphi 0, %s298
    %s302 = sphi 0, %s301
    %s318 = sphi 0, %s302
  $region4: #{_lambda_.1} parent=0 // loop_header_branch
    %22 = sbr.rel (%p20) target = $region8
  $region5: #{_lambda_.1} parent=0 // loop_body
    %s24 = ssub.s32 %s19, 1
    %s25 = ssub.s32 %s19, 2
    %s32 = sadd.s32 1, %s27
    %p33 = scmp.ge.s32.totalorder %s32, 1
    %s34 = scalar_select %p33, 0, %s32
    %s35 = sadd.s32 1, %s26
    %s36 = scalar_select %p33, %s35, %s26
    %p37 = scmp.ge.s32.totalorder %s36, 2
    %s38 = scalar_select %p37, 0, %s36
    %s39 = ssub.s32 %s26, %s38
    %s40 = ssub.s32 %s27, %s34
    %s41 = sor.u32 %s39, %s40
    %p42 = scmp.eq.s32.totalorder %s41, 0
    %s44 = sadd.s32 %s43, 1
    %s45 = scalar_select %p42, %s43, %s44
    %p48 = pneg %p42
    %p49 = scmp.eq.s32.totalorder %s19, 1
    %p50 = por %p48, %p49
    %p51 = scmp.ne.s32.totalorder %s43, %s46
    %p52 = scmp.eq.s32.totalorder %s19, 0
    %p53 = por %p51, %p52
    %p54 = scmp.ne.s32.totalorder %s43, %s46
    %p55 = scmp.eq.s32.totalorder %s24, 1
    %p56 = por %p54, %p55
    %p57 = scmp.ne.s32.totalorder %s46, %s47
    %p58 = scmp.eq.s32.totalorder %s24, 0
    %p59 = por %p57, %p58
    %p60 = scmp.ne.s32.totalorder %s46, %s47
    %p61 = scmp.eq.s32.totalorder %s25, 1
    %p62 = por %p60, %p61
    %p64 = scmp.ne.s32.totalorder %s47, %s63
    %p65 = scmp.eq.s32.totalorder %s25, 0
    %p66 = por %p64, %p65
    %s67 = ssub.s32 %s26, %s38
    %s68 = ssub.s32 %s27, %s34
    %s69 = sor.u32 %s67, %s68
    %p70 = scmp.eq.s32.totalorder %s69, 0
    %s72 = sadd.s32 %s71, 1
    %s73 = scalar_select %p70, %s71, %s72
    %p76 = pneg %p70
    %p77 = scmp.eq.s32.totalorder %s19, 1
    %p78 = por %p76, %p77
    %p79 = scmp.ne.s32.totalorder %s71, %s74
    %p80 = scmp.eq.s32.totalorder %s19, 0
    %p81 = por %p79, %p80
    %p82 = scmp.ne.s32.totalorder %s71, %s74
    %p83 = scmp.eq.s32.totalorder %s24, 1
    %p84 = por %p82, %p83
    %p85 = scmp.ne.s32.totalorder %s74, %s75
    %p86 = scmp.eq.s32.totalorder %s24, 0
    %p87 = por %p85, %p86
    %p88 = scmp.ne.s32.totalorder %s74, %s75
    %p89 = scmp.eq.s32.totalorder %s25, 1
    %p90 = por %p88, %p89
    %p92 = scmp.ne.s32.totalorder %s75, %s91
    %p93 = scmp.eq.s32.totalorder %s25, 0
    %p94 = por %p92, %p93
    %s95 = ssub.s32 %s26, %s38
    %p96 = scmp.eq.s32.totalorder %s95, 0
    %s98 = sadd.s32 %s97, 1
    %s99 = scalar_select %p96, %s97, %s98
    %p102 = pneg %p96
    %p103 = scmp.eq.s32.totalorder %s19, 1
    %p104 = por %p102, %p103
    %p105 = scmp.ne.s32.totalorder %s97, %s100
    %p106 = scmp.eq.s32.totalorder %s19, 0
    %p107 = por %p105, %p106
    %p108 = scmp.ne.s32.totalorder %s97, %s100
    %p109 = scmp.eq.s32.totalorder %s24, 1
    %p110 = por %p108, %p109
    %p111 = scmp.ne.s32.totalorder %s100, %s101
    %p112 = scmp.eq.s32.totalorder %s24, 0
    %p113 = por %p111, %p112
    %p114 = scmp.ne.s32.totalorder %s100, %s101
    %p115 = scmp.eq.s32.totalorder %s25, 1
    %p116 = por %p114, %p115
    %p118 = scmp.ne.s32.totalorder %s101, %s117
    %p119 = scmp.eq.s32.totalorder %s25, 0
    %p120 = por %p118, %p119
    %s121 = ssub.s32 %s26, %s38
    %p122 = scmp.eq.s32.totalorder %s121, 0
    %s124 = sadd.s32 %s123, 1
    %s125 = scalar_select %p122, %s123, %s124
    %p128 = pneg %p122
    %p129 = scmp.eq.s32.totalorder %s19, 1
    %p130 = por %p128, %p129
    %p131 = scmp.ne.s32.totalorder %s123, %s126
    %p132 = scmp.eq.s32.totalorder %s19, 0
    %p133 = por %p131, %p132
    %p134 = scmp.ne.s32.totalorder %s123, %s126
    %p135 = scmp.eq.s32.totalorder %s24, 1
    %p136 = por %p134, %p135
    %p137 = scmp.ne.s32.totalorder %s126, %s127
    %p138 = scmp.eq.s32.totalorder %s24, 0
    %p139 = por %p137, %p138
    %p140 = scmp.ne.s32.totalorder %s126, %s127
    %p141 = scmp.eq.s32.totalorder %s25, 1
    %p142 = por %p140, %p141
    %p144 = scmp.ne.s32.totalorder %s127, %s143
    %p145 = scmp.eq.s32.totalorder %s25, 0
    %p146 = por %p144, %p145
    %s148 = sadd.s32 %s147, 1
    %p151 = scmp.eq.s32.totalorder %s19, 1
    %p152 = scmp.ne.s32.totalorder %s147, %s149
    %p153 = scmp.eq.s32.totalorder %s19, 0
    %p154 = por %p152, %p153
    %p155 = scmp.ne.s32.totalorder %s147, %s149
    %p156 = scmp.eq.s32.totalorder %s24, 1
    %p157 = por %p155, %p156
    %p158 = scmp.ne.s32.totalorder %s149, %s150
    %p159 = scmp.eq.s32.totalorder %s24, 0
    %p160 = por %p158, %p159
    %p161 = scmp.ne.s32.totalorder %s149, %s150
    %p162 = scmp.eq.s32.totalorder %s25, 1
    %p163 = por %p161, %p162
    %p165 = scmp.ne.s32.totalorder %s150, %s164
    %p166 = scmp.eq.s32.totalorder %s25, 0
    %p167 = por %p165, %p166
    %s169 = sadd.s32 %s168, 1
    %p172 = scmp.eq.s32.totalorder %s19, 1
    %p173 = scmp.ne.s32.totalorder %s168, %s170
    %p174 = scmp.eq.s32.totalorder %s19, 0
    %p175 = por %p173, %p174
    %p176 = scmp.ne.s32.totalorder %s168, %s170
    %p177 = scmp.eq.s32.totalorder %s24, 1
    %p178 = por %p176, %p177
    %p179 = scmp.ne.s32.totalorder %s170, %s171
    %p180 = scmp.eq.s32.totalorder %s24, 0
    %p181 = por %p179, %p180
    %p182 = scmp.ne.s32.totalorder %s170, %s171
    %p183 = scmp.eq.s32.totalorder %s25, 1
    %p184 = por %p182, %p183
    %p186 = scmp.ne.s32.totalorder %s171, %s185
    %p187 = scmp.eq.s32.totalorder %s25, 0
    %p188 = por %p186, %p187
    %s190 = sadd.s32 %s189, 1
    %p193 = scmp.eq.s32.totalorder %s19, 1
    %p194 = scmp.ne.s32.totalorder %s189, %s191
    %p195 = scmp.eq.s32.totalorder %s19, 0
    %p196 = por %p194, %p195
    %p197 = scmp.ne.s32.totalorder %s189, %s191
    %p198 = scmp.eq.s32.totalorder %s24, 1
    %p199 = por %p197, %p198
    %p200 = scmp.ne.s32.totalorder %s191, %s192
    %p201 = scmp.eq.s32.totalorder %s24, 0
    %p202 = por %p200, %p201
    %p203 = scmp.ne.s32.totalorder %s191, %s192
    %p204 = scmp.eq.s32.totalorder %s25, 1
    %p205 = por %p203, %p204
    %p207 = scmp.ne.s32.totalorder %s192, %s206
    %p208 = scmp.eq.s32.totalorder %s25, 0
    %p209 = por %p207, %p208
    %s211 = sadd.s32 %s210, 1
    %p214 = scmp.eq.s32.totalorder %s19, 1
    %p215 = scmp.ne.s32.totalorder %s210, %s212
    %p216 = scmp.eq.s32.totalorder %s19, 0
    %p217 = por %p215, %p216
    %p218 = scmp.ne.s32.totalorder %s210, %s212
    %p219 = scmp.eq.s32.totalorder %s24, 1
    %p220 = por %p218, %p219
    %p221 = scmp.ne.s32.totalorder %s212, %s213
    %p222 = scmp.eq.s32.totalorder %s24, 0
    %p223 = por %p221, %p222
    %p224 = scmp.ne.s32.totalorder %s212, %s213
    %p225 = scmp.eq.s32.totalorder %s25, 1
    %p226 = por %p224, %p225
    %p228 = scmp.ne.s32.totalorder %s213, %s227
    %p229 = scmp.eq.s32.totalorder %s25, 0
    %p230 = por %p228, %p229
    %s232 = sadd.s32 %s231, 1
    %p235 = scmp.eq.s32.totalorder %s19, 1
    %p236 = scmp.ne.s32.totalorder %s231, %s233
    %p237 = scmp.eq.s32.totalorder %s19, 0
    %p238 = por %p236, %p237
    %p239 = scmp.ne.s32.totalorder %s231, %s233
    %p240 = scmp.eq.s32.totalorder %s24, 1
    %p241 = por %p239, %p240
    %p242 = scmp.ne.s32.totalorder %s233, %s234
    %p243 = scmp.eq.s32.totalorder %s24, 0
    %p244 = por %p242, %p243
    %p245 = scmp.ne.s32.totalorder %s233, %s234
    %p246 = scmp.eq.s32.totalorder %s25, 1
    %p247 = por %p245, %p246
    %p249 = scmp.ne.s32.totalorder %s234, %s248
    %p250 = scmp.eq.s32.totalorder %s25, 0
    %p251 = por %p249, %p250
    %s253 = sadd.s32 %s252, 1
    %p256 = scmp.eq.s32.totalorder %s19, 1
    %p257 = scmp.ne.s32.totalorder %s252, %s254
    %p258 = scmp.eq.s32.totalorder %s19, 0
    %p259 = por %p257, %p258
    %p260 = scmp.ne.s32.totalorder %s252, %s254
    %p261 = scmp.eq.s32.totalorder %s24, 1
    %p262 = por %p260, %p261
    %p263 = scmp.ne.s32.totalorder %s254, %s255
    %p264 = scmp.eq.s32.totalorder %s24, 0
    %p265 = por %p263, %p264
    %p266 = scmp.ne.s32.totalorder %s254, %s255
    %p267 = scmp.eq.s32.totalorder %s25, 1
    %p268 = por %p266, %p267
    %p270 = scmp.ne.s32.totalorder %s255, %s269
    %p271 = scmp.eq.s32.totalorder %s25, 0
    %p272 = por %p270, %p271
    %s274 = sadd.s32 %s273, 1
    %p277 = scmp.eq.s32.totalorder %s19, 1
    %p278 = scmp.ne.s32.totalorder %s273, %s275
    %p279 = scmp.eq.s32.totalorder %s19, 0
    %p280 = por %p278, %p279
    %p281 = scmp.ne.s32.totalorder %s273, %s275
    %p282 = scmp.eq.s32.totalorder %s24, 1
    %p283 = por %p281, %p282
    %p284 = scmp.ne.s32.totalorder %s275, %s276
    %p285 = scmp.eq.s32.totalorder %s24, 0
    %p286 = por %p284, %p285
    %p287 = scmp.ne.s32.totalorder %s275, %s276
    %p288 = scmp.eq.s32.totalorder %s25, 1
    %p289 = por %p287, %p288
    %p291 = scmp.ne.s32.totalorder %s276, %s290
    %p292 = scmp.eq.s32.totalorder %s25, 0
    %p293 = por %p291, %p292
    %s294 = ssub.s32 %s26, %s38
    %s295 = ssub.s32 %s27, %s34
    %s296 = sor.u32 %s294, %s295
    %p297 = scmp.eq.s32.totalorder %s296, 0
    %s299 = sadd.s32 %s298, 1
    %s300 = scalar_select %p297, %s298, %s299
    %p303 = pneg %p297
    %p304 = scmp.eq.s32.totalorder %s19, 1
    %p305 = por %p303, %p304
    %p306 = scmp.ne.s32.totalorder %s298, %s301
    %p307 = scmp.eq.s32.totalorder %s19, 0
    %p308 = por %p306, %p307
    %p309 = scmp.ne.s32.totalorder %s298, %s301
    %p310 = scmp.eq.s32.totalorder %s24, 1
    %p311 = por %p309, %p310
    %p312 = scmp.ne.s32.totalorder %s301, %s302
    %p313 = scmp.eq.s32.totalorder %s24, 0
    %p314 = por %p312, %p313
    %p315 = scmp.ne.s32.totalorder %s301, %s302
    %p316 = scmp.eq.s32.totalorder %s25, 1
    %p317 = por %p315, %p316
    %p319 = scmp.ne.s32.totalorder %s302, %s318
    %p320 = scmp.eq.s32.totalorder %s25, 0
    %p321 = por %p319, %p320
    %p322 = scmp.le.s32.totalorder 1, %s19
    %p323 = scmp.lt.s32.totalorder %s19, 3
    %p324 = pnand %p322, %p323
    %p325 = pneg %p324
    // Predicated region
    $region9: #{_lambda_.1} parent=5 // pred_check
      _
    $region10: #{_lambda_.1} parent=5 // pred_check_branch
      %327 = sbr.rel (%p324) target = $region12
    $region11: #{_lambda_.1} parent=5 // pred_region
      %s328 = ssub.s32 %s19, 1
      // Predicated region
      $region13: #{_lambda_.1} parent=11 // pred_check
        %p329 = pneg %p160
      $region14: #{_lambda_.1} parent=11 // pred_check_branch
        %331 = sbr.rel (%p329) target = $region16
      $region15: #{_lambda_.1} parent=11 // pred_region
        _
      $region16: #{_lambda_.1} parent=11 // pred_fallthru
        _
      // Predicated region
      $region17: #{_lambda_.1} parent=11 // pred_check
        %p332 = pneg %p181
      $region18: #{_lambda_.1} parent=11 // pred_check_branch
        %334 = sbr.rel (%p332) target = $region20
      $region19: #{_lambda_.1} parent=11 // pred_region
        _
      $region20: #{_lambda_.1} parent=11 // pred_fallthru
        _
      // Predicated region
      $region21: #{_lambda_.1} parent=11 // pred_check
        %p335 = pneg %p202
      $region22: #{_lambda_.1} parent=11 // pred_check_branch
        %337 = sbr.rel (%p335) target = $region24
      $region23: #{_lambda_.1} parent=11 // pred_region
        _
      $region24: #{_lambda_.1} parent=11 // pred_fallthru
        _
      // Predicated region
      $region25: #{_lambda_.1} parent=11 // pred_check
        %p338 = pneg %p223
      $region26: #{_lambda_.1} parent=11 // pred_check_branch
        %340 = sbr.rel (%p338) target = $region28
      $region27: #{_lambda_.1} parent=11 // pred_region
        _
      $region28: #{_lambda_.1} parent=11 // pred_fallthru
        _
      // Predicated region
      $region29: #{_lambda_.1} parent=11 // pred_check
        %p341 = pneg %p244
      $region30: #{_lambda_.1} parent=11 // pred_check_branch
        %343 = sbr.rel (%p341) target = $region32
      $region31: #{_lambda_.1} parent=11 // pred_region
        _
      $region32: #{_lambda_.1} parent=11 // pred_fallthru
        _
      // Predicated region
      $region33: #{_lambda_.1} parent=11 // pred_check
        %p344 = pneg %p265
      $region34: #{_lambda_.1} parent=11 // pred_check_branch
        %346 = sbr.rel (%p344) target = $region36
      $region35: #{_lambda_.1} parent=11 // pred_region
        _
      $region36: #{_lambda_.1} parent=11 // pred_fallthru
        _
      // Predicated region
      $region37: #{_lambda_.1} parent=11 // pred_check
        %p347 = pneg %p286
      $region38: #{_lambda_.1} parent=11 // pred_check_branch
        %349 = sbr.rel (%p347) target = $region40
      $region39: #{_lambda_.1} parent=11 // pred_region
        _
      $region40: #{_lambda_.1} parent=11 // pred_fallthru
        _
    $region12: #{_lambda_.1} parent=5 // pred_fallthru
      _
    %p350 = scmp.lt.s32.totalorder %s19, 2
    // Predicated region
    $region41: #{_lambda_.1} parent=5 // pred_check
      %p351 = pneg %p350
    $region42: #{_lambda_.1} parent=5 // pred_check_branch
      %353 = sbr.rel (%p351) target = $region44
    $region43: #{_lambda_.1} parent=5 // pred_region
      // Predicated region
      $region45: #{_lambda_.1} parent=43 // pred_check
        %p354 = pneg %p53
      $region46: #{_lambda_.1} parent=43 // pred_check_branch
        %356 = sbr.rel (%p354) target = $region48
      $region47: #{_lambda_.1} parent=43 // pred_region
        %p357 = scmp.lt.s32.totalorder %s26, 1
        %s358 = scalar_select %p357, %s26, 1
        %p359 = scmp.lt.s32.totalorder %s27, 0
        %s360 = scalar_select %p359, %s27, 0
        %s361 = smul.addr %s358, 3
        %s362 = sadd.s32 %s360, %s361
        %s363 = smul.addr %s362, 8
        %s364 = scalar_lea.vmem %s0, %s363
      $region48: #{_lambda_.1} parent=43 // pred_fallthru
        _
      // Predicated region
      $region49: #{_lambda_.1} parent=43 // pred_check
        %p365 = pneg %p81
      $region50: #{_lambda_.1} parent=43 // pred_check_branch
        %367 = sbr.rel (%p365) target = $region52
      $region51: #{_lambda_.1} parent=43 // pred_region
        %p368 = scmp.lt.s32.totalorder %s26, 1
        %s369 = scalar_select %p368, %s26, 1
        %p370 = scmp.lt.s32.totalorder %s27, 0
        %s371 = scalar_select %p370, %s27, 0
        %s372 = sadd.s32 %s371, %s369
        %s373 = scalar_lea.vmem %s1, %s372
      $region52: #{_lambda_.1} parent=43 // pred_fallthru
        _
      // Predicated region
      $region53: #{_lambda_.1} parent=43 // pred_check
        %p374 = pneg %p107
      $region54: #{_lambda_.1} parent=43 // pred_check_branch
        %376 = sbr.rel (%p374) target = $region56
      $region55: #{_lambda_.1} parent=43 // pred_region
        %p377 = scmp.lt.s32.totalorder %s26, 1
        %s378 = scalar_select %p377, %s26, 1
        %s379 = smul.addr %s378, 20
        %s380 = smul.addr %s379, 4
        %s381 = scalar_lea.vmem %s2, %s380
      $region56: #{_lambda_.1} parent=43 // pred_fallthru
        _
      // Predicated region
      $region57: #{_lambda_.1} parent=43 // pred_check
        %p382 = pneg %p133
      $region58: #{_lambda_.1} parent=43 // pred_check_branch
        %384 = sbr.rel (%p382) target = $region60
      $region59: #{_lambda_.1} parent=43 // pred_region
        %p385 = scmp.lt.s32.totalorder %s26, 1
        %s386 = scalar_select %p385, %s26, 1
        %s387 = smul.addr %s386, 20
        %s388 = smul.addr %s387, 8
        %s389 = scalar_lea.vmem %s3, %s388
      $region60: #{_lambda_.1} parent=43 // pred_fallthru
        _
    $region44: #{_lambda_.1} parent=5 // pred_fallthru
      _
    %p390 = scmp.le.s32.totalorder 1, %s19
    %p391 = scmp.lt.s32.totalorder %s19, 3
    %p392 = pnand %p390, %p391
    %p393 = pneg %p392
    // Predicated region
    $region61: #{_lambda_.1} parent=5 // pred_check
      _
    $region62: #{_lambda_.1} parent=5 // pred_check_branch
      %395 = sbr.rel (%p392) target = $region64
    $region63: #{_lambda_.1} parent=5 // pred_region
      %s396 = ssub.s32 %s19, 1
      %p397 = scmp.lt.s32.totalorder %s28, 1
      %s398 = scalar_select %p397, %s28, 1
      %p399 = scmp.lt.s32.totalorder %s29, 0
      %s400 = scalar_select %p399, %s29, 0
      %s401 = smul.addr %s398, 3
      %s402 = sadd.s32 %s400, %s401
      %s403 = smul.addr %s402, 8
      %s404 = scalar_lea.vmem %s0, %s403
      %p405 = pneg %p59
      %p406 = pneg %p56
      %p407 = scmp.lt.s32.totalorder %s28, 1
      %s408 = scalar_select %p407, %s28, 1
      %p409 = scmp.lt.s32.totalorder %s29, 0
      %s410 = scalar_select %p409, %s29, 0
      %s411 = sadd.s32 %s410, %s408
      %s412 = scalar_lea.vmem %s1, %s411
      %p413 = pneg %p87
      %p414 = pneg %p84
      %p415 = scmp.lt.s32.totalorder %s28, 1
      %s416 = scalar_select %p415, %s28, 1
      %s417 = smul.addr %s416, 20
      %s418 = smul.addr %s417, 4
      %s419 = scalar_lea.vmem %s2, %s418
      %p420 = pneg %p113
      %p421 = pneg %p110
      %p422 = scmp.lt.s32.totalorder %s28, 1
      %s423 = scalar_select %p422, %s28, 1
      %s424 = smul.addr %s423, 20
      %s425 = smul.addr %s424, 8
      %s426 = scalar_lea.vmem %s3, %s425
      %p427 = pneg %p139
      %p428 = pneg %p136
      %p429 = pneg %p160
      %p430 = pneg %p157
      %p431 = pneg %p181
      %p432 = pneg %p178
      %p433 = pneg %p202
      %p434 = pneg %p199
      %p435 = pneg %p223
      %p436 = pneg %p220
      %p437 = pneg %p244
      %p438 = pneg %p241
      %p439 = pneg %p265
      %p440 = pneg %p262
      %p441 = pneg %p286
      %p442 = pneg %p283
      %p443 = pneg %p314
      %p444 = pneg %p311
      %p445 = scmp.lt.s32.totalorder %s28, 1
      %s446 = scalar_select %p445, %s28, 1
      %p447 = scmp.lt.s32.totalorder %s29, 0
      %s448 = scalar_select %p447, %s29, 0
      %s449 = sadd.s32 %s448, %s446
      %s450 = smul.addr %s449, 4
      %s451 = scalar_lea.vmem %s11, %s450
      %p452 = scmp.lt.s32.totalorder %s28, 1
      %s453 = scalar_select %p452, %s28, 1
      %p454 = scmp.lt.s32.totalorder %s29, 0
      %s455 = scalar_select %p454, %s29, 0
      %s456 = smul.addr %s453, 3
      %s457 = sadd.s32 %s455, %s456
      %s458 = smul.addr %s457, 8
      %s459 = scalar_lea.vmem %s0, %s458
      %p460 = scmp.lt.s32.totalorder %s28, 1
      %s461 = scalar_select %p460, %s28, 1
      %p462 = scmp.lt.s32.totalorder %s29, 0
      %s463 = scalar_select %p462, %s29, 0
      %s464 = sadd.s32 %s463, %s461
      %s465 = scalar_lea.vmem %s1, %s464
      %p466 = scmp.lt.s32.totalorder %s28, 1
      %s467 = scalar_select %p466, %s28, 1
      %s468 = smul.addr %s467, 20
      %s469 = smul.addr %s468, 4
      %s470 = scalar_lea.vmem %s2, %s469
      %p471 = scmp.lt.s32.totalorder %s28, 1
      %s472 = scalar_select %p471, %s28, 1
      %s473 = smul.addr %s472, 20
      %s474 = smul.addr %s473, 8
      %s475 = scalar_lea.vmem %s3, %s474
      %p476 = scmp.lt.s32.totalorder %s28, 1
      %s477 = scalar_select %p476, %s28, 1
      %p478 = scmp.lt.s32.totalorder %s29, 0
      %s479 = scalar_select %p478, %s29, 0
      %s480 = sadd.s32 %s479, %s477
      %s481 = smul.addr %s480, 4
      %s482 = scalar_lea.vmem %s11, %s481
      %v484 = vld [vmem:[%s459] sm:$0xff]
      %v485 = vld [vmem:[%s459 + $0x8] sm:$0xff]
      %v486 = vld [vmem:[%s459 + $0x10] sm:$0xff]
      %v487 = vpack.c.bf16 %v485, %v484
      %v488 = vpack.c.bf16 %v486, %v486
      %v489 = vld [vmem:[%s465] sm:$0x1]
      %v490 = vlaneseq
      %v491 = vshrl.u32 %v490, 7
      %v492 = vadd.s32 %v491, 8
      %v493 = vperm.slane %v489, 0
      %vm494 = vcmp.eq.s32.totalorder %v491, %v493
      %vm495 = vcmp.eq.s32.totalorder %v492, %v493
      %v496 = vsel %vm494, 1, 0
      %v497 = vsel %vm495, 1, 0
      %v498 = vcvt.s32.f32 %v496
      %v499 = vcvt.s32.f32 %v497
      %v500 = vpack.c.bf16 %v499, %v498
      %v501 = vld [vmem:[%s4] sm:$0xf]
      %v502 = vld [vmem:[%s4 + $0x4] sm:$0xf]
      %v503 = vld [vmem:[%s4 + $0x8] sm:$0xf]
      %v504 = vld [vmem:[%s4 + $0xc] sm:$0xf]
      %v505 = vld [vmem:[%s5] sm:$0xf]
      %v506 = vld [vmem:[%s5 + $0x4] sm:$0xf]
      %v507 = vld [vmem:[%s5 + $0x8] sm:$0xf]
      %v508 = vld [vmem:[%s5 + $0xc] sm:$0xf]
      %v513 = vunpack.c.l.b16 %v505
      %v514 = vunpack.c.l.b16 %v506
      %v515 = vunpack.c.l.b16 %v507
      %v516 = vunpack.c.l.b16 %v508
      %v517 = vpack.c.b16 %v514, %v513
      %v518 = vpack.c.b16 %v516, %v515
      %vm519 = vcmask 97280
      %v521 = vsel %vm519, %v517, 0
      %v524 = vsel %vm519, %v518, 0
      %vm526 = vcmask 1045504
      %v528 = vsel %vm526, %v500, 0
      %530 = vmatpush.bf16.msra.mxu0 0
      %531 = vmatpush.bf16.msra.mxu0 0
      %532 = vmatpush.bf16.msra.mxu0 0
      %533 = vmatpush.bf16.msra.mxu0 0
      %534 = vmatpush.bf16.msra.mxu0 0
      %535 = vmatpush.bf16.msra.mxu0 0
      %536 = vmatpush.bf16.msra.mxu0 0
      %537 = vmatpush.bf16.msra.mxu0 %v528
      %538 = vmatmul.bf16.gmra.mxu0 %v521
      %v539 = vpop.f32.mrf.mxu0
      %v540 = vadd.f32 0.0, %v539
      %v541 = vpop.f32.mrf.mxu0
      %v542 = vadd.f32 0.0, %v541
      %543 = vmatmul.bf16.gmra.mxu0 %v524
      %v544 = vpop.f32.mrf.mxu0
      %v545 = vadd.f32 0.0, %v544
      %v546 = vpop.f32.mrf.mxu0
      %v547 = vadd.f32 0.0, %v546
      %548 = vdwg.mxu0
      %v553 = vunpack.c.l.b16 %v501
      %v554 = vunpack.c.l.b16 %v502
      %v555 = vunpack.c.l.b16 %v503
      %v556 = vunpack.c.l.b16 %v504
      %v557 = vpack.c.b16 %v554, %v553
      %v558 = vpack.c.b16 %v556, %v555
      %vm559 = vcmask 195584
      %v561 = vsel %vm559, %v557, 0
      %v564 = vsel %vm559, %v558, 0
      %vm566 = vcmask 1043456
      %v568 = vsel %vm566, %v488, 0
      %570 = vmatpush.bf16.msra.mxu0 0
      %571 = vmatpush.bf16.msra.mxu0 0
      %572 = vmatpush.bf16.msra.mxu0 0
      %573 = vmatpush.bf16.msra.mxu0 0
      %574 = vmatpush.bf16.msra.mxu0 0
      %575 = vmatpush.bf16.msra.mxu0 0
      %576 = vmatpush.bf16.msra.mxu0 %v568
      %577 = vmatpush.bf16.msra.mxu0 %v487
      %578 = vmatmul.bf16.gmra.mxu0 %v561
      %v579 = vpop.f32.mrf.mxu0
      %v580 = vadd.f32 %v540, %v579
      %v581 = vpop.f32.mrf.mxu0
      %v582 = vadd.f32 %v542, %v581
      %583 = vmatmul.bf16.gmra.mxu0 %v564
      %v584 = vpop.f32.mrf.mxu0
      %v585 = vadd.f32 %v545, %v584
      %v586 = vpop.f32.mrf.mxu0
      %v587 = vadd.f32 %v547, %v586
      %588 = vdwg.mxu0
      %v589 = vld [vmem:[%s6] sm:$0xff]
      %v590 = vld [vmem:[%s6 + $0x8] sm:$0xff]
      %v591 = vld [vmem:[%s6 + $0x10] sm:$0xff]
      %v592 = vld [vmem:[%s6 + $0x18] sm:$0xff]
      %594 = vset.pattern.permute.xlu0 0
      %595 = vperm.xlu0 %594, %v589
      %v596 = vpop.permute.xlu0 %595
      %599 = vset.pattern.permute.xlu0 0
      %600 = vperm.xlu0 %599, %v590
      %v601 = vpop.permute.xlu0 %600
      %604 = vset.pattern.permute.xlu0 0
      %605 = vperm.xlu0 %604, %v591
      %v606 = vpop.permute.xlu0 %605
      %609 = vset.pattern.permute.xlu0 0
      %610 = vperm.xlu0 %609, %v592
      %v611 = vpop.permute.xlu0 %610
      %v613 = vadd.f32 %v580, %v596
      %v614 = vadd.f32 %v582, %v601
      %v615 = vadd.f32 %v585, %v606
      %v616 = vadd.f32 %v587, %v611
      %vm617 = vcmp.ge.f32.partialorder %v613, 0.0
      %vm618 = vcmp.ge.f32.partialorder %v614, 0.0
      %vm619 = vcmp.ge.f32.partialorder %v615, 0.0
      %vm620 = vcmp.ge.f32.partialorder %v616, 0.0
      %v621 = vmul.f32 %v613, 0.2
      %v622 = vmul.f32 %v614, 0.2
      %v623 = vmul.f32 %v615, 0.2
      %v624 = vmul.f32 %v616, 0.2
      %v625 = vsel %vm617, %v613, %v621
      %v626 = vsel %vm618, %v614, %v622
      %v627 = vsel %vm619, %v615, %v623
      %v628 = vsel %vm620, %v616, %v624
      %v629 = vpack.c.bf16 %v626, %v625
      %v630 = vpack.c.bf16 %v628, %v627
      %v631 = vld [vmem:[%s470] sm:$0xf]
      %v632 = vld [vmem:[%s470 + $0x4] sm:$0xf]
      %v633 = vld [vmem:[%s470 + $0x8] sm:$0xf]
      %v634 = vld [vmem:[%s470 + $0xc] sm:$0xf]
      %v635 = vld [vmem:[%s475] sm:$0xff]
      %v636 = vld [vmem:[%s475 + $0x8] sm:$0xff]
      %v637 = vld [vmem:[%s475 + $0x10] sm:$0xff]
      %v638 = vld [vmem:[%s475 + $0x18] sm:$0xff]
      %640 = vset.pattern.permute.xlu0 0
      %641 = vperm.xlu0 %640, %v635
      %v642 = vpop.permute.xlu0 %641
      %645 = vset.pattern.permute.xlu0 0
      %646 = vperm.xlu0 %645, %v636
      %v647 = vpop.permute.xlu0 %646
      %650 = vset.pattern.permute.xlu0 0
      %651 = vperm.xlu0 %650, %v637
      %v652 = vpop.permute.xlu0 %651
      %655 = vset.pattern.permute.xlu0 0
      %656 = vperm.xlu0 %655, %v638
      %v657 = vpop.permute.xlu0 %656
      %v663 = vunpack.c.l.b16 %v631
      %v664 = vunpack.c.l.b16 %v632
      %v665 = vunpack.c.l.b16 %v633
      %v666 = vunpack.c.l.b16 %v634
      %v667 = vpack.c.b16 %v664, %v663
      %v668 = vpack.c.b16 %v666, %v665
      %vm669 = vcmask 261120
      %v671 = vsel %vm669, %v667, 0
      %v674 = vsel %vm669, %v668, 0
      %676 = vmatpush.bf16.msra.mxu0 0
      %677 = vmatpush.bf16.msra.mxu0 0
      %678 = vmatpush.bf16.msra.mxu0 0
      %679 = vmatpush.bf16.msra.mxu0 0
      %680 = vmatpush.bf16.msra.mxu0 0
      %681 = vmatpush.bf16.msra.mxu0 0
      %682 = vmatpush.bf16.msra.mxu0 %v630
      %683 = vmatpush.bf16.msra.mxu0 %v629
      %684 = vmatmul.bf16.gmra.mxu0 %v671
      %v685 = vpop.f32.mrf.mxu0
      %v686 = vadd.f32 %v642, %v685
      %v687 = vpop.f32.mrf.mxu0
      %v688 = vadd.f32 %v647, %v687
      %689 = vmatmul.bf16.gmra.mxu0 %v674
      %v690 = vpop.f32.mrf.mxu0
      %v691 = vadd.f32 %v652, %v690
      %v692 = vpop.f32.mrf.mxu0
      %v693 = vadd.f32 %v657, %v692
      %694 = vdwg.mxu0
      %vm695 = vcmp.ge.f32.partialorder %v686, 0.0
      %vm696 = vcmp.ge.f32.partialorder %v688, 0.0
      %vm697 = vcmp.ge.f32.partialorder %v691, 0.0
      %vm698 = vcmp.ge.f32.partialorder %v693, 0.0
      %v699 = vmul.f32 %v686, 0.2
      %v700 = vmul.f32 %v688, 0.2
      %v701 = vmul.f32 %v691, 0.2
      %v702 = vmul.f32 %v693, 0.2
      %v703 = vsel %vm695, %v686, %v699
      %v704 = vsel %vm696, %v688, %v700
      %v705 = vsel %vm697, %v691, %v701
      %v706 = vsel %vm698, %v693, %v702
      %v707 = vpack.c.bf16 %v704, %v703
      %v708 = vpack.c.bf16 %v706, %v705
      %s709 = scalar_lea.vmem %s470, 16
      %v710 = vld [vmem:[%s709] sm:$0xf]
      %v711 = vld [vmem:[%s709 + $0x4] sm:$0xf]
      %v712 = vld [vmem:[%s709 + $0x8] sm:$0xf]
      %v713 = vld [vmem:[%s709 + $0xc] sm:$0xf]
      %s714 = scalar_lea.vmem %s475, 32
      %v715 = vld [vmem:[%s714] sm:$0xff]
      %v716 = vld [vmem:[%s714 + $0x8] sm:$0xff]
      %v717 = vld [vmem:[%s714 + $0x10] sm:$0xff]
      %v718 = vld [vmem:[%s714 + $0x18] sm:$0xff]
      %720 = vset.pattern.permute.xlu0 0
      %721 = vperm.xlu0 %720, %v715
      %v722 = vpop.permute.xlu0 %721
      %725 = vset.pattern.permute.xlu0 0
      %726 = vperm.xlu0 %725, %v716
      %v727 = vpop.permute.xlu0 %726
      %730 = vset.pattern.permute.xlu0 0
      %731 = vperm.xlu0 %730, %v717
      %v732 = vpop.permute.xlu0 %731
      %735 = vset.pattern.permute.xlu0 0
      %736 = vperm.xlu0 %735, %v718
      %v737 = vpop.permute.xlu0 %736
      %v743 = vunpack.c.l.b16 %v710
      %v744 = vunpack.c.l.b16 %v711
      %v745 = vunpack.c.l.b16 %v712
      %v746 = vunpack.c.l.b16 %v713
      %v747 = vpack.c.b16 %v744, %v743
      %v748 = vpack.c.b16 %v746, %v745
      %v750 = vsel %vm669, %v747, 0
      %v753 = vsel %vm669, %v748, 0
      %755 = vmatpush.bf16.msra.mxu0 0
      %756 = vmatpush.bf16.msra.mxu0 0
      %757 = vmatpush.bf16.msra.mxu0 0
      %758 = vmatpush.bf16.msra.mxu0 0
      %759 = vmatpush.bf16.msra.mxu0 0
      %760 = vmatpush.bf16.msra.mxu0 0
      %761 = vmatpush.bf16.msra.mxu0 %v708
      %762 = vmatpush.bf16.msra.mxu0 %v707
      %763 = vmatmul.bf16.gmra.mxu0 %v750
      %v764 = vpop.f32.mrf.mxu0
      %v765 = vadd.f32 %v722, %v764
      %v766 = vpop.f32.mrf.mxu0
      %v767 = vadd.f32 %v727, %v766
      %768 = vmatmul.bf16.gmra.mxu0 %v753
      %v769 = vpop.f32.mrf.mxu0
      %v770 = vadd.f32 %v732, %v769
      %v771 = vpop.f32.mrf.mxu0
      %v772 = vadd.f32 %v737, %v771
      %773 = vdwg.mxu0
      %vm774 = vcmp.ge.f32.partialorder %v765, 0.0
      %vm775 = vcmp.ge.f32.partialorder %v767, 0.0
      %vm776 = vcmp.ge.f32.partialorder %v770, 0.0
      %vm777 = vcmp.ge.f32.partialorder %v772, 0.0
      %v778 = vmul.f32 %v765, 0.2
      %v779 = vmul.f32 %v767, 0.2
      %v780 = vmul.f32 %v770, 0.2
      %v781 = vmul.f32 %v772, 0.2
      %v782 = vsel %vm774, %v765, %v778
      %v783 = vsel %vm775, %v767, %v779
      %v784 = vsel %vm776, %v770, %v780
      %v785 = vsel %vm777, %v772, %v781
      %v786 = vpack.c.bf16 %v783, %v782
      %v787 = vpack.c.bf16 %v785, %v784
      %s788 = scalar_lea.vmem %s470, 32
      %v789 = vld [vmem:[%s788] sm:$0xf]
      %v790 = vld [vmem:[%s788 + $0x4] sm:$0xf]
      %v791 = vld [vmem:[%s788 + $0x8] sm:$0xf]
      %v792 = vld [vmem:[%s788 + $0xc] sm:$0xf]
      %s793 = scalar_lea.vmem %s475, 64
      %v794 = vld [vmem:[%s793] sm:$0xff]
      %v795 = vld [vmem:[%s793 + $0x8] sm:$0xff]
      %v796 = vld [vmem:[%s793 + $0x10] sm:$0xff]
      %v797 = vld [vmem:[%s793 + $0x18] sm:$0xff]
      %799 = vset.pattern.permute.xlu0 0
      %800 = vperm.xlu0 %799, %v794
      %v801 = vpop.permute.xlu0 %800
      %804 = vset.pattern.permute.xlu0 0
      %805 = vperm.xlu0 %804, %v795
      %v806 = vpop.permute.xlu0 %805
      %809 = vset.pattern.permute.xlu0 0
      %810 = vperm.xlu0 %809, %v796
      %v811 = vpop.permute.xlu0 %810
      %814 = vset.pattern.permute.xlu0 0
      %815 = vperm.xlu0 %814, %v797
      %v816 = vpop.permute.xlu0 %815
      %v822 = vunpack.c.l.b16 %v789
      %v823 = vunpack.c.l.b16 %v790
      %v824 = vunpack.c.l.b16 %v791
      %v825 = vunpack.c.l.b16 %v792
      %v826 = vpack.c.b16 %v823, %v822
      %v827 = vpack.c.b16 %v825, %v824
      %v829 = vsel %vm669, %v826, 0
      %v832 = vsel %vm669, %v827, 0
      %834 = vmatpush.bf16.msra.mxu0 0
      %835 = vmatpush.bf16.msra.mxu0 0
      %836 = vmatpush.bf16.msra.mxu0 0
      %837 = vmatpush.bf16.msra.mxu0 0
      %838 = vmatpush.bf16.msra.mxu0 0
      %839 = vmatpush.bf16.msra.mxu0 0
      %840 = vmatpush.bf16.msra.mxu0 %v787
      %841 = vmatpush.bf16.msra.mxu0 %v786
      %842 = vmatmul.bf16.gmra.mxu0 %v829
      %v843 = vpop.f32.mrf.mxu0
      %v844 = vadd.f32 %v801, %v843
      %v845 = vpop.f32.mrf.mxu0
      %v846 = vadd.f32 %v806, %v845
      %847 = vmatmul.bf16.gmra.mxu0 %v832
      %v848 = vpop.f32.mrf.mxu0
      %v849 = vadd.f32 %v811, %v848
      %v850 = vpop.f32.mrf.mxu0
      %v851 = vadd.f32 %v816, %v850
      %852 = vdwg.mxu0
      %vm853 = vcmp.ge.f32.partialorder %v844, 0.0
      %vm854 = vcmp.ge.f32.partialorder %v846, 0.0
      %vm855 = vcmp.ge.f32.partialorder %v849, 0.0
      %vm856 = vcmp.ge.f32.partialorder %v851, 0.0
      %v857 = vmul.f32 %v844, 0.2
      %v858 = vmul.f32 %v846, 0.2
      %v859 = vmul.f32 %v849, 0.2
      %v860 = vmul.f32 %v851, 0.2
      %v861 = vsel %vm853, %v844, %v857
      %v862 = vsel %vm854, %v846, %v858
      %v863 = vsel %vm855, %v849, %v859
      %v864 = vsel %vm856, %v851, %v860
      %v865 = vpack.c.bf16 %v862, %v861
      %v866 = vpack.c.bf16 %v864, %v863
      %v867 = vld [vmem:[%s7] sm:$0x1]
      %v868 = vld [vmem:[#allocation2] sm:$0x1]
      %870 = vset.pattern.permute.xlu0 0
      %871 = vperm.xlu0 %870, %v868
      %v872 = vpop.permute.xlu0 %871
      %v874 = vperm.slane %v872, 0
      %v876 = vsel %vm669, %v867, 0
      %878 = vmatpush.bf16.msra.mxu0 0
      %879 = vmatpush.bf16.msra.mxu0 0
      %880 = vmatpush.bf16.msra.mxu0 0
      %881 = vmatpush.bf16.msra.mxu0 0
      %882 = vmatpush.bf16.msra.mxu0 0
      %883 = vmatpush.bf16.msra.mxu0 0
      %884 = vmatpush.bf16.msra.mxu0 %v866
      %885 = vmatpush.bf16.msra.mxu0 %v865
      %886 = vmatmul.bf16.gmra.mxu0 %v876
      %v887 = vpop.f32.mrf.mxu0
      %v888 = vadd.f32 %v874, %v887
      %v889 = vpop.f32.mrf.mxu0
      %890 = vdwg.mxu0
      %s891 = scalar_lea.vmem %s470, 48
      %v892 = vld [vmem:[%s891] sm:$0xf]
      %v893 = vld [vmem:[%s891 + $0x4] sm:$0xf]
      %v894 = vld [vmem:[%s891 + $0x8] sm:$0xf]
      %v895 = vld [vmem:[%s891 + $0xc] sm:$0xf]
      %s896 = scalar_lea.vmem %s475, 96
      %v897 = vld [vmem:[%s896] sm:$0xff]
      %v898 = vld [vmem:[%s896 + $0x8] sm:$0xff]
      %v899 = vld [vmem:[%s896 + $0x10] sm:$0xff]
      %v900 = vld [vmem:[%s896 + $0x18] sm:$0xff]
      %902 = vset.pattern.permute.xlu0 0
      %903 = vperm.xlu0 %902, %v897
      %v904 = vpop.permute.xlu0 %903
      %907 = vset.pattern.permute.xlu0 0
      %908 = vperm.xlu0 %907, %v898
      %v909 = vpop.permute.xlu0 %908
      %912 = vset.pattern.permute.xlu0 0
      %913 = vperm.xlu0 %912, %v899
      %v914 = vpop.permute.xlu0 %913
      %917 = vset.pattern.permute.xlu0 0
      %918 = vperm.xlu0 %917, %v900
      %v919 = vpop.permute.xlu0 %918
      %v925 = vunpack.c.l.b16 %v892
      %v926 = vunpack.c.l.b16 %v893
      %v927 = vunpack.c.l.b16 %v894
      %v928 = vunpack.c.l.b16 %v895
      %v929 = vpack.c.b16 %v926, %v925
      %v930 = vpack.c.b16 %v928, %v927
      %v932 = vsel %vm669, %v929, 0
      %v935 = vsel %vm669, %v930, 0
      %937 = vmatpush.bf16.msra.mxu0 0
      %938 = vmatpush.bf16.msra.mxu0 0
      %939 = vmatpush.bf16.msra.mxu0 0
      %940 = vmatpush.bf16.msra.mxu0 0
      %941 = vmatpush.bf16.msra.mxu0 0
      %942 = vmatpush.bf16.msra.mxu0 0
      %943 = vmatpush.bf16.msra.mxu0 %v866
      %944 = vmatpush.bf16.msra.mxu0 %v865
      %945 = vmatmul.bf16.gmra.mxu0 %v932
      %v946 = vpop.f32.mrf.mxu0
      %v947 = vadd.f32 %v904, %v946
      %v948 = vpop.f32.mrf.mxu0
      %v949 = vadd.f32 %v909, %v948
      %950 = vmatmul.bf16.gmra.mxu0 %v935
      %v951 = vpop.f32.mrf.mxu0
      %v952 = vadd.f32 %v914, %v951
      %v953 = vpop.f32.mrf.mxu0
      %v954 = vadd.f32 %v919, %v953
      %955 = vdwg.mxu0
      %vm956 = vcmp.ge.f32.partialorder %v947, 0.0
      %vm957 = vcmp.ge.f32.partialorder %v949, 0.0
      %vm958 = vcmp.ge.f32.partialorder %v952, 0.0
      %vm959 = vcmp.ge.f32.partialorder %v954, 0.0
      %v960 = vmul.f32 %v947, 0.2
      %v961 = vmul.f32 %v949, 0.2
      %v962 = vmul.f32 %v952, 0.2
      %v963 = vmul.f32 %v954, 0.2
      %v964 = vsel %vm956, %v947, %v960
      %v965 = vsel %vm957, %v949, %v961
      %v966 = vsel %vm958, %v952, %v962
      %v967 = vsel %vm959, %v954, %v963
      %v968 = vpack.c.bf16 %v965, %v964
      %v969 = vpack.c.bf16 %v967, %v966
      %s970 = scalar_lea.vmem %s470, 64
      %v971 = vld [vmem:[%s970] sm:$0xf]
      %v972 = vld [vmem:[%s970 + $0x4] sm:$0xf]
      %v973 = vld [vmem:[%s970 + $0x8] sm:$0xf]
      %v974 = vld [vmem:[%s970 + $0xc] sm:$0xf]
      %s975 = scalar_lea.vmem %s475, 128
      %v976 = vld [vmem:[%s975] sm:$0xff]
      %v977 = vld [vmem:[%s975 + $0x8] sm:$0xff]
      %v978 = vld [vmem:[%s975 + $0x10] sm:$0xff]
      %v979 = vld [vmem:[%s975 + $0x18] sm:$0xff]
      %981 = vset.pattern.permute.xlu0 0
      %982 = vperm.xlu0 %981, %v976
      %v983 = vpop.permute.xlu0 %982
      %986 = vset.pattern.permute.xlu0 0
      %987 = vperm.xlu0 %986, %v977
      %v988 = vpop.permute.xlu0 %987
      %991 = vset.pattern.permute.xlu0 0
      %992 = vperm.xlu0 %991, %v978
      %v993 = vpop.permute.xlu0 %992
      %996 = vset.pattern.permute.xlu0 0
      %997 = vperm.xlu0 %996, %v979
      %v998 = vpop.permute.xlu0 %997
      %v1004 = vunpack.c.l.b16 %v971
      %v1005 = vunpack.c.l.b16 %v972
      %v1006 = vunpack.c.l.b16 %v973
      %v1007 = vunpack.c.l.b16 %v974
      %v1008 = vpack.c.b16 %v1005, %v1004
      %v1009 = vpack.c.b16 %v1007, %v1006
      %v1011 = vsel %vm669, %v1008, 0
      %v1014 = vsel %vm669, %v1009, 0
      %1016 = vmatpush.bf16.msra.mxu0 0
      %1017 = vmatpush.bf16.msra.mxu0 0
      %1018 = vmatpush.bf16.msra.mxu0 0
      %1019 = vmatpush.bf16.msra.mxu0 0
      %1020 = vmatpush.bf16.msra.mxu0 0
      %1021 = vmatpush.bf16.msra.mxu0 0
      %1022 = vmatpush.bf16.msra.mxu0 %v969
      %1023 = vmatpush.bf16.msra.mxu0 %v968
      %1024 = vmatmul.bf16.gmra.mxu0 %v1011
      %v1025 = vpop.f32.mrf.mxu0
      %v1026 = vadd.f32 %v983, %v1025
      %v1027 = vpop.f32.mrf.mxu0
      %v1028 = vadd.f32 %v988, %v1027
      %1029 = vmatmul.bf16.gmra.mxu0 %v1014
      %v1030 = vpop.f32.mrf.mxu0
      %v1031 = vadd.f32 %v993, %v1030
      %v1032 = vpop.f32.mrf.mxu0
      %v1033 = vadd.f32 %v998, %v1032
      %1034 = vdwg.mxu0
      %vm1035 = vcmp.ge.f32.partialorder %v1026, 0.0
      %vm1036 = vcmp.ge.f32.partialorder %v1028, 0.0
      %vm1037 = vcmp.ge.f32.partialorder %v1031, 0.0
      %vm1038 = vcmp.ge.f32.partialorder %v1033, 0.0
      %v1039 = vmul.f32 %v1026, 0.2
      %v1040 = vmul.f32 %v1028, 0.2
      %v1041 = vmul.f32 %v1031, 0.2
      %v1042 = vmul.f32 %v1033, 0.2
      %v1043 = vsel %vm1035, %v1026, %v1039
      %v1044 = vsel %vm1036, %v1028, %v1040
      %v1045 = vsel %vm1037, %v1031, %v1041
      %v1046 = vsel %vm1038, %v1033, %v1042
      %v1047 = vpack.c.bf16 %v1044, %v1043
      %v1048 = vpack.c.bf16 %v1046, %v1045
      %v1049 = vld [vmem:[%s9] sm:$0x3]
      %v1050 = vld [vmem:[%s10] sm:$0x7]
      %1052 = vset.pattern.permute.xlu0 0
      %1053 = vperm.xlu0 %1052, %v1050
      %v1054 = vpop.permute.xlu0 %1053
      %v1057 = vsel %vm669, %v1049, 0
      %1059 = vmatpush.bf16.msra.mxu0 0
      %1060 = vmatpush.bf16.msra.mxu0 0
      %1061 = vmatpush.bf16.msra.mxu0 0
      %1062 = vmatpush.bf16.msra.mxu0 0
      %1063 = vmatpush.bf16.msra.mxu0 0
      %1064 = vmatpush.bf16.msra.mxu0 0
      %1065 = vmatpush.bf16.msra.mxu0 %v1048
      %1066 = vmatpush.bf16.msra.mxu0 %v1047
      %1067 = vmatmul.bf16.gmra.mxu0 %v1057
      %v1068 = vpop.f32.mrf.mxu0
      %v1069 = vadd.f32 %v1054, %v1068
      %v1070 = vpop.f32.mrf.mxu0
      %1071 = vdwg.mxu0
      %1072 = vst [vmem:[%s482] sm:$0x1] %v888
      %1073 = vst [vmem:[%s482 + $0x1] sm:$0x7] %v1069
      %p1074 = scmp.lt.s32.totalorder %s28, 1
      %s1075 = scalar_select %p1074, %s28, 1
      %p1076 = scmp.lt.s32.totalorder %s29, 0
      %s1077 = scalar_select %p1076, %s29, 0
      %s1078 = sadd.s32 %s1077, %s1075
      %s1079 = smul.addr %s1078, 4
      %s1080 = scalar_lea.vmem %s11, %s1079
      // Predicated region
      $region65: #{_lambda_.1} parent=63 // pred_check
        %p1081 = pneg %p311
      $region66: #{_lambda_.1} parent=63 // pred_check_branch
        %1083 = sbr.rel (%p1081) target = $region68
      $region67: #{_lambda_.1} parent=63 // pred_region
        _
      $region68: #{_lambda_.1} parent=63 // pred_fallthru
        _
    $region64: #{_lambda_.1} parent=5 // pred_fallthru
      _
    %p1084 = scmp.le.s32.totalorder 2, %s19
    // Predicated region
    $region69: #{_lambda_.1} parent=5 // pred_check
      %p1085 = pneg %p1084
    $region70: #{_lambda_.1} parent=5 // pred_check_branch
      %1087 = sbr.rel (%p1085) target = $region72
    $region71: #{_lambda_.1} parent=5 // pred_region
      %s1088 = ssub.s32 %s19, 2
      // Predicated region
      $region73: #{_lambda_.1} parent=71 // pred_check
        %p1089 = pneg %p317
      $region74: #{_lambda_.1} parent=71 // pred_check_branch
        %1091 = sbr.rel (%p1089) target = $region76
      $region75: #{_lambda_.1} parent=71 // pred_region
        %p1092 = scmp.lt.s32.totalorder %s30, 1
        %s1093 = scalar_select %p1092, %s30, 1
        %p1094 = scmp.lt.s32.totalorder %s31, 0
        %s1095 = scalar_select %p1094, %s31, 0
        %s1096 = sadd.s32 %s1095, %s1093
        %s1097 = smul.addr %s1096, 4
        %s1098 = scalar_lea.vmem %s11, %s1097
      $region76: #{_lambda_.1} parent=71 // pred_fallthru
        _
    $region72: #{_lambda_.1} parent=5 // pred_fallthru
      _
  $region6: #{_lambda_.1} parent=0 // loop_footer
    %s23 = sadd.s32 1, %s19
  $region7: #{_lambda_.1} parent=0 // loop_footer_branch
    %18 = sbr.rel target = $region3
  $region8: #{_lambda_.1} parent=0 // loop_exit
    _

</llo_original>
